<compile_context>
chip_gen: v5e
topology: v5e:2x2
jax: 0.10.0
libtpu: 0.0.40
codegen_flags: <defaults>
</compile_context>

<pallas_src>
import functools

import jax
import jax.numpy as jnp
from jax.experimental import pallas as pl
from jax.experimental.pallas import tpu as pltpu


_IGNORE_INDEX = -100  # PyTorch CrossEntropyLoss default


def _ce_kernel(logits_ref, target_ref, nll_ref, m_sc, l_sc, t_sc, *,
               num_classes, tile_c, mask_c, ignore_index):
    """One (row-tile, class-tile) grid step of streaming cross-entropy.

    logits_ref : (TILE_N, TILE_C) input dtype (bf16/f32), VMEM
    target_ref : (TILE_N, 1) int32, VMEM
    nll_ref    : (TILE_N, 1) f32 output (written on last class tile)
    m_sc/l_sc/t_sc : (TILE_N, 1) f32 scratch — running max, running sum of
                     exp, and target-logit accumulator.
    """
    ci = pl.program_id(1)
    last_ci = pl.num_programs(1) - 1

    @pl.when(ci == 0)
    def _init():
        m_sc[...] = jnp.full(m_sc.shape, -jnp.inf, dtype=m_sc.dtype)
        l_sc[...] = jnp.zeros(l_sc.shape, dtype=l_sc.dtype)
        t_sc[...] = jnp.zeros(t_sc.shape, dtype=t_sc.dtype)

    x = logits_ref[...]                                 # stays in input dtype
    tgt = target_ref[...]                               # (TILE_N, 1) int32

    # Chunk-local column index; shift the (TILE_N,1) comparand, not the iota.
    col = jax.lax.broadcasted_iota(jnp.int32, x.shape, 1)
    tgt_local = tgt - ci * tile_c                       # (TILE_N, 1)

    zero = jnp.array(0, dtype=x.dtype)
    neg_inf = jnp.array(-jnp.inf, dtype=x.dtype)

    def _chunk(xv):
        # Target-logit contribution (select in input dtype; only one lane can
        # match per row, so summing in the input dtype is exact).
        hit = jnp.where(col == tgt_local, xv, zero)
        t_sc[...] += jnp.sum(hit, axis=-1, keepdims=True).astype(jnp.float32)

        # Online (streaming) logsumexp across class chunks.
        m_prev = m_sc[...]
        m_chunk = jnp.max(xv, axis=-1, keepdims=True).astype(jnp.float32)
        m_new = jnp.maximum(m_prev, m_chunk)
        p = jnp.exp(xv.astype(jnp.float32) - m_new)     # upcast only here
        l_sc[...] = (l_sc[...] * jnp.exp(m_prev - m_new)
                     + jnp.sum(p, axis=-1, keepdims=True))
        m_sc[...] = m_new

    if mask_c:
        rem = num_classes % tile_c                      # static, > 0 here

        @pl.when(ci != last_ci)
        def _fast():                                    # no padding -> no mask
            _chunk(x)

        @pl.when(ci == last_ci)
        def _tail():                                    # mask padded lanes
            _chunk(jnp.where(col < rem, x, neg_inf))
    else:
        _chunk(x)

    @pl.when(ci == last_ci)
    def _finalize():
        lse = m_sc[...] + jnp.log(l_sc[...])
        nll = lse - t_sc[...]                           # (TILE_N, 1)
        valid = tgt != ignore_index
        nll_ref[...] = jnp.where(valid, nll, 0.0)


def _choose_tile_c(c, max_tile_c):
    """Full C when small; else prefer a multiple of 128 that divides C
    (no tail mask); else max_tile_c with a masked last chunk."""
    if c <= max_tile_c:
        return c, False
    cap = max(128, (max_tile_c // 128) * 128)
    best = 0
    t = cap
    while t >= 128:
        if c % t == 0:
            best = t
            break
        t -= 128
    if best >= min(512, cap):
        return best, False
    return cap, (c % cap) != 0


def _choose_tile_n(n, tile_c, itemsize, budget_bytes=8 * 1024 * 1024):
    """Row (sublane) tile: multiple of 8, logits tile ~<= budget_bytes; split
    into >= 2 row tiles when possible so v7x's two TensorCores both work."""
    tile_n = budget_bytes // max(1, tile_c * itemsize)
    tile_n = max(8, (tile_n // 8) * 8)
    if tile_n >= n:
        half = -(-n // 2)                       # cdiv(n, 2)
        half = ((half + 7) // 8) * 8            # round up to multiple of 8
        tile_n = half if (8 <= half < n) else n
    return tile_n


def cross_entropy_loss(logits, target, *, ignore_index=_IGNORE_INDEX,
                       max_tile_c=2048):
    """Equivalent of nn.CrossEntropyLoss()(logits, target) for (N, C) logits."""
    n, c = logits.shape
    itemsize = jnp.dtype(logits.dtype).itemsize

    tile_c, mask_c = _choose_tile_c(c, max_tile_c)
    tile_n = _choose_tile_n(n, tile_c, itemsize)

    num_n_tiles = pl.cdiv(n, tile_n)
    num_c_tiles = pl.cdiv(c, tile_c)

    tgt2d = target.astype(jnp.int32).reshape(n, 1)

    kernel = functools.partial(
        _ce_kernel,
        num_classes=c,
        tile_c=tile_c,
        mask_c=mask_c,
        ignore_index=ignore_index,
    )

    cost = pl.CostEstimate(
        flops=4 * n * c,
        transcendentals=n * c,
        bytes_accessed=n * c * itemsize + 2 * n * 4,
    )

    per_row_nll = pl.pallas_call(
        kernel,
        out_shape=jax.ShapeDtypeStruct((n, 1), jnp.float32),
        grid_spec=pltpu.PrefetchScalarGridSpec(
            num_scalar_prefetch=0,
            grid=(num_n_tiles, num_c_tiles),
            in_specs=[
                pl.BlockSpec((tile_n, tile_c), lambda i, k: (i, k)),   # logits
                pl.BlockSpec((tile_n, 1), lambda i, k: (i, 0)),        # targets
            ],
            out_specs=pl.BlockSpec((tile_n, 1), lambda i, k: (i, 0)),  # per-row nll
            scratch_shapes=[pltpu.VMEM((tile_n, 1), jnp.float32)] * 3,
        ),
        compiler_params=pltpu.CompilerParams(
            dimension_semantics=("parallel", "arbitrary"),
            vmem_limit_bytes=48 * 1024 * 1024),
        cost_estimate=cost,
    )(logits, tgt2d)

    # Final mean in the wrapper: divide by #non-ignored targets (PyTorch
    # 'mean' semantics with ignore_index), never by TILE_N.
    num_valid = jnp.sum(target != ignore_index).astype(jnp.float32)
    return jnp.sum(per_row_nll[:, 0]) / num_valid


def _ref_loss(logits, target, ignore_index=_IGNORE_INDEX):
    logp = jax.nn.log_softmax(logits.astype(jnp.float32), axis=-1)
    safe_tgt = jnp.where(target == ignore_index, 0, target)
    nll = -jnp.take_along_axis(logp, safe_tgt[:, None], axis=-1)[:, 0]
    valid = (target != ignore_index).astype(jnp.float32)
    return jnp.sum(nll * valid) / jnp.sum(valid)


if __name__ == "__main__":
    key = jax.random.PRNGKey(0)
    k1, k2, k3, k4 = jax.random.split(key, 4)

    # --- small base case: logits (N, C) = (8, 32), target (N,) -------------
    N, C = 8, 32
    logits = jax.random.normal(k1, (N, C), dtype=jnp.float32)
    target = jax.random.randint(k2, (N,), 0, C, dtype=jnp.int32)

    loss = cross_entropy_loss(logits, target)
    jax.block_until_ready(loss)
    ref = _ref_loss(logits, target)
    assert jnp.allclose(loss, ref, atol=1e-5, rtol=1e-5), (loss, ref)

    # ignore_index=-100 path (PyTorch default)
    target_ig = target.at[0].set(_IGNORE_INDEX)
    loss_ig = cross_entropy_loss(logits, target_ig)
    jax.block_until_ready(loss_ig)
    ref_ig = _ref_loss(logits, target_ig)
    assert jnp.allclose(loss_ig, ref_ig, atol=1e-5, rtol=1e-5), (loss_ig, ref_ig)

    # --- exercise multi-chunk online-LSE, tail-mask and partial row tile ----
    # C=320 with max_tile_c=128 -> 3 class chunks, last one masked (rem=64);
    # N=36 -> 2 row tiles (24 + partial 12); bf16 logits; one ignored target.
    N2, C2 = 36, 320
    logits2 = jax.random.normal(k3, (N2, C2), dtype=jnp.float32).astype(jnp.bfloat16)
    target2 = jax.random.randint(k4, (N2,), 0, C2, dtype=jnp.int32)
    target2 = target2.at[3].set(_IGNORE_INDEX)

    loss2 = cross_entropy_loss(logits2, target2, max_tile_c=128)
    jax.block_until_ready(loss2)
    ref2 = _ref_loss(logits2, target2)
    assert jnp.allclose(loss2, ref2, atol=2e-3, rtol=2e-3), (loss2, ref2)

    print("KERNEL_OK")
</pallas_src>

<mosaic_0001>
module attributes {stable_mosaic.version = 11 : i64} {
  func.func @_ce_kernel(%arg0: i32, %arg1: i32, %arg2: memref<8x32xf32, #tpu.memory_space<vmem>>, %arg3: memref<8x1xi32, #tpu.memory_space<vmem>>, %arg4: memref<8x1xf32, #tpu.memory_space<vmem>>, %arg5: memref<8x1xf32, #tpu.memory_space<vmem>>, %arg6: memref<8x1xf32, #tpu.memory_space<vmem>>, %arg7: memref<8x1xf32, #tpu.memory_space<vmem>>) attributes {dimension_semantics = [#tpu.dimension_semantics<parallel>, #tpu.dimension_semantics<arbitrary>], iteration_bounds = array<i64: 1, 1>, scalar_prefetch = 0 : i64, scratch_operands = 3 : i64, tpu.core_type = #tpu.core_type<tc>, window_params = [{transform_indices = @transform_0, window_bounds = array<i64: 8, 32>}, {transform_indices = @transform_1, window_bounds = array<i64: 8, 1>}, {transform_indices = @transform_2, window_bounds = array<i64: 8, 1>}]} {
    %c0_i32 = arith.constant 0 : i32
    %0 = arith.cmpi eq, %arg1, %c0_i32 : i32
    %1 = arith.extui %0 : i1 to i32
    %c0_i32_0 = arith.constant 0 : i32
    %2 = arith.cmpi ne, %1, %c0_i32_0 : i32
    scf.if %2 {
      %cst_21 = arith.constant 0xFF800000 : f32
      %37 = vector.broadcast %cst_21 : f32 to vector<8x1xf32>
      %c0_22 = arith.constant 0 : index
      %c0_23 = arith.constant 0 : index
      %38 = vector.load %arg5[%c0_22, %c0_23] : memref<8x1xf32, #tpu.memory_space<vmem>>, vector<8x1xf32>
      tpu.vector_store %arg5[%c0_22, %c0_23], %37 {strides = array<i32>} : memref<8x1xf32, #tpu.memory_space<vmem>>, vector<8x1xf32>,
      %cst_24 = arith.constant 0.000000e+00 : f32
      %39 = vector.broadcast %cst_24 : f32 to vector<8x1xf32>
      %c0_25 = arith.constant 0 : index
      %c0_26 = arith.constant 0 : index
      %40 = vector.load %arg6[%c0_25, %c0_26] : memref<8x1xf32, #tpu.memory_space<vmem>>, vector<8x1xf32>
      tpu.vector_store %arg6[%c0_25, %c0_26], %39 {strides = array<i32>} : memref<8x1xf32, #tpu.memory_space<vmem>>, vector<8x1xf32>,
      %cst_27 = arith.constant 0.000000e+00 : f32
      %41 = vector.broadcast %cst_27 : f32 to vector<8x1xf32>
      %c0_28 = arith.constant 0 : index
      %c0_29 = arith.constant 0 : index
      %42 = vector.load %arg7[%c0_28, %c0_29] : memref<8x1xf32, #tpu.memory_space<vmem>>, vector<8x1xf32>
      tpu.vector_store %arg7[%c0_28, %c0_29], %41 {strides = array<i32>} : memref<8x1xf32, #tpu.memory_space<vmem>>, vector<8x1xf32>,
    } else {
    }
    %c0 = arith.constant 0 : index
    %c0_1 = arith.constant 0 : index
    %3 = vector.load %arg2[%c0, %c0_1] : memref<8x32xf32, #tpu.memory_space<vmem>>, vector<8x32xf32>
    %c0_2 = arith.constant 0 : index
    %c0_3 = arith.constant 0 : index
    %4 = vector.load %arg3[%c0_2, %c0_3] : memref<8x1xi32, #tpu.memory_space<vmem>>, vector<8x1xi32>
    %5 = tpu.iota {dimensions = array<i32: 1>} : vector<8x32xi32>
    %c32_i32 = arith.constant 32 : i32
    %6 = arith.muli %arg1, %c32_i32 : i32
    %7 = vector.broadcast %6 : i32 to vector<8x1xi32>
    %8 = arith.subi %4, %7 : vector<8x1xi32>
    %9 = vector.broadcast %8 : vector<8x1xi32> to vector<8x32xi32>
    %10 = arith.cmpi eq, %5, %9 : vector<8x32xi32>
    %cst = arith.constant 0.000000e+00 : f32
    %11 = vector.broadcast %cst : f32 to vector<8x32xf32>
    %12 = arith.select %10, %3, %11 : vector<8x32xi1>, vector<8x32xf32>
    %c0_4 = arith.constant 0 : index
    %c0_5 = arith.constant 0 : index
    %13 = vector.load %arg7[%c0_4, %c0_5] : memref<8x1xf32, #tpu.memory_space<vmem>>, vector<8x1xf32>
    %cst_6 = arith.constant dense<0.000000e+00> : vector<8xf32>
    %14 = vector.multi_reduction <add>, %12, %cst_6 [1] : vector<8x32xf32> to vector<8xf32>
    %15 = vector.shape_cast %14 : vector<8xf32> to vector<8x1xf32>
    %16 = arith.addf %13, %15 : vector<8x1xf32>
    %c0_7 = arith.constant 0 : index
    %c0_8 = arith.constant 0 : index
    %17 = vector.load %arg7[%c0_7, %c0_8] : memref<8x1xf32, #tpu.memory_space<vmem>>, vector<8x1xf32>
    tpu.vector_store %arg7[%c0_7, %c0_8], %16 {strides = array<i32>} : memref<8x1xf32, #tpu.memory_space<vmem>>, vector<8x1xf32>,
    %c0_9 = arith.constant 0 : index
    %c0_10 = arith.constant 0 : index
    %18 = vector.load %arg5[%c0_9, %c0_10] : memref<8x1xf32, #tpu.memory_space<vmem>>, vector<8x1xf32>
    %cst_11 = arith.constant dense<0xFF800000> : vector<8xf32>
    %19 = vector.multi_reduction <maximumf>, %3, %cst_11 [1] : vector<8x32xf32> to vector<8xf32>
    %20 = vector.shape_cast %19 : vector<8xf32> to vector<8x1xf32>
    %21 = arith.maximumf %18, %20 : vector<8x1xf32>
    %22 = vector.broadcast %21 : vector<8x1xf32> to vector<8x32xf32>
    %23 = arith.subf %3, %22 : vector<8x32xf32>
    %24 = math.exp %23 : vector<8x32xf32>
    %c0_12 = arith.constant 0 : index
    %c0_13 = arith.constant 0 : index
    %25 = vector.load %arg6[%c0_12, %c0_13] : memref<8x1xf32, #tpu.memory_space<vmem>>, vector<8x1xf32>
    %26 = arith.subf %18, %21 : vector<8x1xf32>
    %27 = math.exp %26 : vector<8x1xf32>
    %28 = arith.mulf %25, %27 : vector<8x1xf32>
    %cst_14 = arith.constant dense<0.000000e+00> : vector<8xf32>
    %29 = vector.multi_reduction <add>, %24, %cst_14 [1] : vector<8x32xf32> to vector<8xf32>
    %30 = vector.shape_cast %29 : vector<8xf32> to vector<8x1xf32>
    %31 = arith.addf %28, %30 : vector<8x1xf32>
    %c0_15 = arith.constant 0 : index
    %c0_16 = arith.constant 0 : index
    %32 = vector.load %arg6[%c0_15, %c0_16] : memref<8x1xf32, #tpu.memory_space<vmem>>, vector<8x1xf32>
    tpu.vector_store %arg6[%c0_15, %c0_16], %31 {strides = array<i32>} : memref<8x1xf32, #tpu.memory_space<vmem>>, vector<8x1xf32>,
    %c0_17 = arith.constant 0 : index
    %c0_18 = arith.constant 0 : index
    %33 = vector.load %arg5[%c0_17, %c0_18] : memref<8x1xf32, #tpu.memory_space<vmem>>, vector<8x1xf32>
    tpu.vector_store %arg5[%c0_17, %c0_18], %21 {strides = array<i32>} : memref<8x1xf32, #tpu.memory_space<vmem>>, vector<8x1xf32>,
    %c0_i32_19 = arith.constant 0 : i32
    %34 = arith.cmpi eq, %arg1, %c0_i32_19 : i32
    %35 = arith.extui %34 : i1 to i32
    %c0_i32_20 = arith.constant 0 : i32
    %36 = arith.cmpi ne, %35, %c0_i32_20 : i32
    scf.if %36 {
      %c0_21 = arith.constant 0 : index
      %c0_22 = arith.constant 0 : index
      %37 = vector.load %arg5[%c0_21, %c0_22] : memref<8x1xf32, #tpu.memory_space<vmem>>, vector<8x1xf32>
      %c0_23 = arith.constant 0 : index
      %c0_24 = arith.constant 0 : index
      %38 = vector.load %arg6[%c0_23, %c0_24] : memref<8x1xf32, #tpu.memory_space<vmem>>, vector<8x1xf32>
      %39 = math.log %38 : vector<8x1xf32>
      %40 = arith.addf %37, %39 : vector<8x1xf32>
      %c0_25 = arith.constant 0 : index
      %c0_26 = arith.constant 0 : index
      %41 = vector.load %arg7[%c0_25, %c0_26] : memref<8x1xf32, #tpu.memory_space<vmem>>, vector<8x1xf32>
      %42 = arith.subf %40, %41 : vector<8x1xf32>
      %c-100_i32 = arith.constant -100 : i32
      %43 = vector.broadcast %c-100_i32 : i32 to vector<8x1xi32>
      %44 = arith.cmpi ne, %4, %43 : vector<8x1xi32>
      %cst_27 = arith.constant 0.000000e+00 : f32
      %45 = vector.broadcast %cst_27 : f32 to vector<8x1xf32>
      %46 = arith.select %44, %42, %45 : vector<8x1xi1>, vector<8x1xf32>
      %c0_28 = arith.constant 0 : index
      %c0_29 = arith.constant 0 : index
      %47 = vector.load %arg4[%c0_28, %c0_29] : memref<8x1xf32, #tpu.memory_space<vmem>>, vector<8x1xf32>
      tpu.vector_store %arg4[%c0_28, %c0_29], %46 {strides = array<i32>} : memref<8x1xf32, #tpu.memory_space<vmem>>, vector<8x1xf32>,
    } else {
    }
    return
  }
  func.func @transform_0(%arg0: i32, %arg1: i32) -> (i32, i32) {
    %c0_i32 = arith.constant 0 : i32
    return %arg0, %arg1 : i32, i32
  }
  func.func @transform_1(%arg0: i32, %arg1: i32) -> (i32, i32) {
    %c0_i32 = arith.constant 0 : i32
    %c0_i32_0 = arith.constant 0 : i32
    return %arg0, %c0_i32 : i32, i32
  }
  func.func @transform_2(%arg0: i32, %arg1: i32) -> (i32, i32) {
    %c0_i32 = arith.constant 0 : i32
    %c0_i32_0 = arith.constant 0 : i32
    return %arg0, %c0_i32 : i32, i32
  }
}

</mosaic_0001>

<llo_original>
// kernel: tpu_custom_call.1
$region0: #{tpu_custom_call.1}
  #allocation0 [shape = 'u32[]', space=smem, size = 0x4, offset = 0x4, fixed_abs, tag = 'smem constant byte address 0x4 - core index']
  #allocation1 [shape = 'u32[72,128]{1,0:T(1,128)}', space=vmem, size = 0x9000, scoped, tag = 'internal scratch']
  #allocation2 [shape = 'f32[8,1]{1,0:T(8,128)}', space=vmem, size = 0x1000, scoped, tag = 'scratch operand']
  #allocation3 [shape = 'f32[8,1]{1,0:T(8,128)}', space=vmem, size = 0x1000, scoped, tag = 'scratch operand']
  #allocation4 [shape = 'f32[8,1]{1,0:T(8,128)}', space=vmem, size = 0x1000, scoped, tag = 'scratch operand']
  %s0 = inlined_call_operand.vmem [shape: f32[8,32], index: 0, kind: input, shape index: {}]
  %s1 = inlined_call_operand.vmem [shape: s32[8,1], index: 1, kind: input, shape index: {}]
  %s2 = inlined_call_operand.vmem [shape: f32[8,1], index: 2, kind: output, shape index: {}]
  %s3 = sld [smem:[#allocation0]]
  $region26: #{tpu_custom_call.1} parent=0
    _
  %s5 = ssub.s32 1, %s3
  %s6 = scalar_select 0, %s5, %s3
  // Predicated region
  $region2: #{tpu_custom_call.1} parent=0 // pred_check
    _
  $region3: #{tpu_custom_call.1} parent=0 // pred_check_branch
    %8 = sbr.rel (0) target = $region5
  $region4: #{tpu_custom_call.1} parent=0 // pred_region
    _
  $region5: #{tpu_custom_call.1} parent=0 // pred_fallthru
    _
  // Predicated region
  $region6: #{tpu_custom_call.1} parent=0 // pred_check
    _
  $region7: #{tpu_custom_call.1} parent=0 // pred_check_branch
    %10 = sbr.rel (0) target = $region9
  $region8: #{tpu_custom_call.1} parent=0 // pred_region
    _
  $region9: #{tpu_custom_call.1} parent=0 // pred_fallthru
    _
  %p11 = scmp.eq.s32.totalorder 0, 0
  // Predicated region
  $region10: #{tpu_custom_call.1} parent=0 // pred_check
    %p12 = pneg %p11
  $region11: #{tpu_custom_call.1} parent=0 // pred_check_branch
    %14 = sbr.rel (%p12) target = $region13
  $region12: #{tpu_custom_call.1} parent=0 // pred_region
    %vm15 = vcmask 7168
    %16 = vst.msk [vmem:[#allocation2] sm:$0xff] %vm15, -inf
    %17 = vst.msk [vmem:[#allocation3] sm:$0xff] %vm15, 0.0
    %18 = vst.msk [vmem:[#allocation4] sm:$0xff] %vm15, 0.0
  $region13: #{tpu_custom_call.1} parent=0 // pred_fallthru
    _
  %v19 = vld [vmem:[%s0] sm:$0xff]
  %v20 = vld [vmem:[%s1] sm:$0xff]
  %v21 = vlaneseq
  %v22 = vand.u32 %v21, 127
  %s23 = smul.u32 0, 32
  %v24 = vstv %s23
  %v25 = vsub.s32 %v20, %v24
  %26 = vset.pattern.permute.xlu0 0
  %27 = vperm.xlu0 %26, %v25
  %v28 = vpop.permute.xlu0 %27
  %vm29 = vcmp.eq.s32.totalorder %v22, %v28
  %v30 = vsel %vm29, %v19, 0.0
  %v31 = vld [vmem:[#allocation4] sm:$0xff]
  %vm32 = vcmask 261120
  %v33 = vsel %vm32, %v30, 0.0
  %34 = vadd.xlane.f32.xlu0 %v33
  %v35 = vpop.xlane.xlu0 %34
  %v36 = vadd.f32 %v31, %v35
  %vm37 = vcmask 7168
  %38 = vst.msk [vmem:[#allocation4] sm:$0xff] %vm37, %v36
  %v39 = vld [vmem:[#allocation2] sm:$0xff]
  %v40 = vsel %vm32, %v19, -inf
  %41 = vmax.xlane.f32.xlu0 %v40
  %v42 = vpop.xlane.xlu0 %41
  %v43 = vmax.f32 %v39, %v42
  %45 = vset.pattern.permute.xlu0 0
  %46 = vperm.xlu0 %45, %v43
  %v47 = vpop.permute.xlu0 %46
  %v49 = vsub.f32 %v19, %v47
  %v50 = vmul.f32 %v49, 1.442695
  %v51 = vpow.pop %v50
  %v52 = vld [vmem:[#allocation3] sm:$0xff]
  %v53 = vsub.f32 %v39, %v43
  %v54 = vmul.f32 %v53, 1.442695
  %v55 = vpow.pop %v54
  %v56 = vmul.f32 %v52, %v55
  %v57 = vsel %vm32, %v51, 0.0
  %58 = vadd.xlane.f32.xlu0 %v57
  %v59 = vpop.xlane.xlu0 %58
  %v60 = vadd.f32 %v56, %v59
  %61 = vst.msk [vmem:[#allocation3] sm:$0xff] %vm37, %v60
  %62 = vst.msk [vmem:[#allocation2] sm:$0xff] %vm37, %v43
  // Predicated region
  $region14: #{tpu_custom_call.1} parent=0 // pred_check
    %p63 = pneg %p11
  $region15: #{tpu_custom_call.1} parent=0 // pred_check_branch
    %65 = sbr.rel (%p63) target = $region17
  $region16: #{tpu_custom_call.1} parent=0 // pred_region
    %v66 = vld [vmem:[#allocation2] sm:$0xff]
    %v67 = vld [vmem:[#allocation3] sm:$0xff]
    %v68 = vlog2.pop %v67
    %v69 = vmul.f32 %v68, 0.6931472
    %v70 = vadd.f32 %v66, %v69
    %v71 = vld [vmem:[#allocation4] sm:$0xff]
    %v72 = vsub.f32 %v70, %v71
    %vm73 = vcmp.ne.s32.totalorder %v20, 4294967196
    %v74 = vsel %vm73, %v72, 0.0
    %75 = vst.msk [vmem:[%s2] sm:$0xff] %vm37, %v74
  $region17: #{tpu_custom_call.1} parent=0 // pred_fallthru
    _
  // Predicated region
  $region18: #{tpu_custom_call.1} parent=0 // pred_check
    _
  $region19: #{tpu_custom_call.1} parent=0 // pred_check_branch
    %77 = sbr.rel (0) target = $region21
  $region20: #{tpu_custom_call.1} parent=0 // pred_region
    _
  $region21: #{tpu_custom_call.1} parent=0 // pred_fallthru
    _
  // Predicated region
  $region22: #{tpu_custom_call.1} parent=0 // pred_check
    _
  $region23: #{tpu_custom_call.1} parent=0 // pred_check_branch
    %79 = sbr.rel (0) target = $region25
  $region24: #{tpu_custom_call.1} parent=0 // pred_region
    _
  $region25: #{tpu_custom_call.1} parent=0 // pred_fallthru
    _

</llo_original>
